<compile_context>
chip_gen: v7x
topology: tpu7x:2x2x1
jax: 0.10.0
libtpu: 0.0.40
codegen_flags: <defaults>
</compile_context>

<pallas_src>
import functools
import math

import jax
import jax.numpy as jnp
from jax import lax
from jax.experimental import pallas as pl
from jax.experimental.pallas import tpu as pltpu


LN_EPS = 1e-5


def _mln_kernel(x_ref, c_ref, wr_ref, br_ref, wgb_ref, bgb_ref, o_ref):
    f = x_ref.shape[-1]

    # ---- LayerNorm(x) over last dim, no affine (VPU, f32) ----
    x = x_ref[...].astype(jnp.float32)
    inv_f = jnp.float32(1.0 / f)
    mean = jnp.sum(x, axis=-1, keepdims=True) * inv_f
    centered = x - mean
    var = jnp.sum(centered * centered, axis=-1, keepdims=True) * inv_f
    x_ln = centered * lax.rsqrt(var + LN_EPS)

    # ---- reduce: ReLU(c @ Wr + br)  (MXU, operands in wr dtype, f32 accumulation) ----
    c = c_ref[...].astype(wr_ref.dtype)
    h = jnp.dot(c, wr_ref[...], preferred_element_type=jnp.float32) + br_ref[...]
    h = jnp.maximum(h, 0.0)

    # ---- fused gamma|beta head: one (f, 2f) matmul, split at a 128-aligned boundary ----
    gb = jnp.dot(h.astype(wgb_ref.dtype), wgb_ref[...],
                 preferred_element_type=jnp.float32) + bgb_ref[...]
    gamma = gb[:, :f]
    beta = gb[:, f:]

    # ---- modulation (VPU, f32) ----
    o_ref[...] = (gamma * x_ln + beta).astype(o_ref.dtype)


def _round_up(v, mult):
    return ((v + mult - 1) // mult) * mult


@functools.partial(jax.jit, static_argnames=("block_m", "compute_dtype"))
def _mln_forward_2d(x2, c2, wr, br, wg, bg, wb, bb, *, block_m, compute_dtype):
    m, f_dim = x2.shape
    c_dim = c2.shape[1]

    # Pre-fuse gamma/beta weights & biases; cast matmul weights to the MXU dtype.
    wr_c = wr.astype(compute_dtype)                                   # (c_dim, f_dim)
    br_c = br.astype(jnp.float32)                                     # (1, f_dim)
    wgb = jnp.concatenate([wg, wb], axis=1).astype(compute_dtype)     # (f_dim, 2*f_dim)
    bgb = jnp.concatenate([bg, bb], axis=1).astype(jnp.float32)       # (1, 2*f_dim)

    # Pad the token dim up to a multiple of block_m (zero rows are harmless & discarded).
    m_pad = pl.cdiv(m, block_m) * block_m
    if m_pad != m:
        x2 = jnp.pad(x2, ((0, m_pad - m), (0, 0)))
        c2 = jnp.pad(c2, ((0, m_pad - m), (0, 0)))
    grid = (m_pad // block_m,)

    # VMEM budget estimate: double-buffered weights + double-buffered x/c/out tiles + slack.
    wbytes = (wr_c.size * wr_c.dtype.itemsize + wgb.size * wgb.dtype.itemsize
              + br_c.size * br_c.dtype.itemsize + bgb.size * bgb.dtype.itemsize)
    tbytes = block_m * (f_dim * x2.dtype.itemsize
                        + c_dim * c2.dtype.itemsize
                        + f_dim * x2.dtype.itemsize)
    vmem_limit = int(min(max(2 * wbytes + 4 * tbytes + (4 << 20), 32 << 20), 100 << 20))

    flops = (2 * m_pad * c_dim * f_dim          # reduce matmul
             + 2 * m_pad * f_dim * (2 * f_dim)  # fused gamma/beta matmul
             + 12 * m_pad * f_dim)              # LN + ReLU + modulation
    bytes_accessed = (x2.size * x2.dtype.itemsize + c2.size * c2.dtype.itemsize
                      + m_pad * f_dim * x2.dtype.itemsize + wbytes)

    out = pl.pallas_call(
        _mln_kernel,
        out_shape=jax.ShapeDtypeStruct((m_pad, f_dim), x2.dtype),
        grid_spec=pltpu.PrefetchScalarGridSpec(
            num_scalar_prefetch=0,
            grid=grid,
            in_specs=[
                pl.BlockSpec((block_m, f_dim), lambda i: (i, 0)),      # x tile
                pl.BlockSpec((block_m, c_dim), lambda i: (i, 0)),      # c tile
                pl.BlockSpec((c_dim, f_dim), lambda i: (0, 0)),        # Wr  (resident)
                pl.BlockSpec((1, f_dim), lambda i: (0, 0)),            # br
                pl.BlockSpec((f_dim, 2 * f_dim), lambda i: (0, 0)),    # Wg|Wb (resident)
                pl.BlockSpec((1, 2 * f_dim), lambda i: (0, 0)),        # bg|bb
            ],
            out_specs=pl.BlockSpec((block_m, f_dim), lambda i: (i, 0)),
        ),
        compiler_params=pltpu.CompilerParams(
            dimension_semantics=("parallel",),
            vmem_limit_bytes=vmem_limit,
        ),
        cost_estimate=pl.CostEstimate(
            flops=flops, transcendentals=m_pad, bytes_accessed=bytes_accessed),
    )(x2, c2, wr_c, br_c, wgb, bgb)

    return out[:m]


def mln_forward(x, c, params, *, block_m=256, compute_dtype=jnp.bfloat16):
    """x: (..., f_dim), c: (..., c_dim). Returns (..., f_dim), same dtype as x."""
    f_dim = params["wr"].shape[1]
    c_dim = params["wr"].shape[0]
    lead = x.shape[:-1]
    m = math.prod(lead) if lead else 1
    x2 = x.reshape(m, f_dim)
    c2 = c.reshape(m, c_dim)

    # Big token tiles (multiple of 8 sublanes); keep the grid >= 2 when possible so
    # both TensorCores get work on dual-TC chips.
    bm = max(8, min(block_m, _round_up(pl.cdiv(m, 2), 8)))

    out = _mln_forward_2d(x2, c2, params["wr"], params["br"], params["wg"],
                          params["bg"], params["wb"], params["bb"],
                          block_m=bm, compute_dtype=compute_dtype)
    return out.reshape(x.shape)


def init_mln_params(key, c_dim, f_dim, dtype=jnp.float32):
    """`reduce` Linear: PyTorch-default-style uniform init; gamma/beta follow
    MLN.reset_parameters (zero weights, bias = 1 / 0). Weights stored as (in, out)."""
    k1, k2 = jax.random.split(key)
    bound = 1.0 / (c_dim ** 0.5)
    wr = jax.random.uniform(k1, (c_dim, f_dim), dtype, minval=-bound, maxval=bound)
    br = jax.random.uniform(k2, (1, f_dim), dtype, minval=-bound, maxval=bound)
    wg = jnp.zeros((f_dim, f_dim), dtype)     # gamma.weight = 0
    bg = jnp.ones((1, f_dim), dtype)          # gamma.bias   = 1
    wb = jnp.zeros((f_dim, f_dim), dtype)     # beta.weight  = 0
    bb = jnp.zeros((1, f_dim), dtype)         # beta.bias    = 0
    return {"wr": wr, "br": br, "wg": wg, "bg": bg, "wb": wb, "bb": bb}


def mln_reference(x, c, params):
    """Pure-JAX f32 reference matching the PyTorch forward."""
    xf = x.astype(jnp.float32)
    mean = jnp.mean(xf, axis=-1, keepdims=True)
    var = jnp.mean((xf - mean) ** 2, axis=-1, keepdims=True)
    x_ln = (xf - mean) / jnp.sqrt(var + LN_EPS)
    h = jnp.maximum(c.astype(jnp.float32) @ params["wr"].astype(jnp.float32)
                    + params["br"].astype(jnp.float32)[0], 0.0)
    gamma = h @ params["wg"].astype(jnp.float32) + params["bg"].astype(jnp.float32)[0]
    beta = h @ params["wb"].astype(jnp.float32) + params["bb"].astype(jnp.float32)[0]
    return (gamma * x_ln + beta).astype(x.dtype)


if __name__ == "__main__":
    key = jax.random.PRNGKey(0)
    kx, kc, kp, kg, kb = jax.random.split(key, 5)

    batch, seq = 2, 9          # M = 18 tokens -> exercises the padded-tail path
    c_dim, f_dim = 24, 128     # f_dim on the lane axis

    x = jax.random.normal(kx, (batch, seq, f_dim), dtype=jnp.float32)
    c = jax.random.normal(kc, (batch, seq, c_dim), dtype=jnp.float32)

    # 1) Faithful module init (gamma.weight = beta.weight = 0): out == LN(x); tight check.
    params0 = init_mln_params(kp, c_dim, f_dim)
    out0 = jax.block_until_ready(mln_forward(x, c, params0))
    ref0 = mln_reference(x, c, params0)
    assert out0.shape == (batch, seq, f_dim)
    assert jnp.allclose(out0, ref0, atol=1e-5, rtol=1e-5), "mismatch vs reference (LN path)"

    # 2) Non-degenerate gamma/beta weights: exercises the fused bf16-MXU matmul path.
    params1 = dict(params0)
    params1["wg"] = 0.02 * jax.random.normal(kg, (f_dim, f_dim), jnp.float32)
    params1["wb"] = 0.02 * jax.random.normal(kb, (f_dim, f_dim), jnp.float32)
    out1 = jax.block_until_ready(mln_forward(x, c, params1))
    ref1 = mln_reference(x, c, params1)
    assert out1.shape == (batch, seq, f_dim)
    assert bool(jnp.all(jnp.isfinite(out1)))
    assert jnp.allclose(out1, ref1, atol=5e-2, rtol=5e-2), "mismatch vs reference (matmul path)"

    print("KERNEL_OK")
</pallas_src>

<mosaic_0001>
module attributes {stable_mosaic.version = 11 : i64} {
  func.func @_mln_kernel(%arg0: i32, %arg1: memref<16x128xf32, #tpu.memory_space<vmem>>, %arg2: memref<16x24xf32, #tpu.memory_space<vmem>>, %arg3: memref<24x128xbf16, #tpu.memory_space<vmem>>, %arg4: memref<1x128xf32, #tpu.memory_space<vmem>>, %arg5: memref<128x256xbf16, #tpu.memory_space<vmem>>, %arg6: memref<1x256xf32, #tpu.memory_space<vmem>>, %arg7: memref<16x128xf32, #tpu.memory_space<vmem>>) attributes {dimension_semantics = [#tpu.dimension_semantics<parallel>], iteration_bounds = array<i64: 2>, scalar_prefetch = 0 : i64, scratch_operands = 0 : i64, tpu.core_type = #tpu.core_type<tc>, window_params = [{transform_indices = @transform_0, window_bounds = array<i64: 16, 128>}, {transform_indices = @transform_1, window_bounds = array<i64: 16, 24>}, {pipeline_mode = #tpu.pipeline_mode<synchronous>, transform_indices = @transform_2, window_bounds = array<i64: 24, 128>}, {pipeline_mode = #tpu.pipeline_mode<synchronous>, transform_indices = @transform_3, window_bounds = array<i64: 1, 128>}, {pipeline_mode = #tpu.pipeline_mode<synchronous>, transform_indices = @transform_4, window_bounds = array<i64: 128, 256>}, {pipeline_mode = #tpu.pipeline_mode<synchronous>, transform_indices = @transform_5, window_bounds = array<i64: 1, 256>}, {transform_indices = @transform_6, window_bounds = array<i64: 16, 128>}]} {
    %c0 = arith.constant 0 : index
    %c0_0 = arith.constant 0 : index
    %0 = vector.load %arg1[%c0, %c0_0] : memref<16x128xf32, #tpu.memory_space<vmem>>, vector<16x128xf32>
    %cst = arith.constant dense<0.000000e+00> : vector<16xf32>
    %1 = vector.multi_reduction <add>, %0, %cst [1] : vector<16x128xf32> to vector<16xf32>
    %2 = vector.shape_cast %1 : vector<16xf32> to vector<16x1xf32>
    %cst_1 = arith.constant 7.812500e-03 : f32
    %3 = vector.broadcast %cst_1 : f32 to vector<16x1xf32>
    %4 = arith.mulf %2, %3 : vector<16x1xf32>
    %5 = vector.broadcast %4 : vector<16x1xf32> to vector<16x128xf32>
    %6 = arith.subf %0, %5 : vector<16x128xf32>
    %7 = arith.mulf %6, %6 : vector<16x128xf32>
    %cst_2 = arith.constant dense<0.000000e+00> : vector<16xf32>
    %8 = vector.multi_reduction <add>, %7, %cst_2 [1] : vector<16x128xf32> to vector<16xf32>
    %9 = vector.shape_cast %8 : vector<16xf32> to vector<16x1xf32>
    %cst_3 = arith.constant 7.812500e-03 : f32
    %10 = vector.broadcast %cst_3 : f32 to vector<16x1xf32>
    %11 = arith.mulf %9, %10 : vector<16x1xf32>
    %cst_4 = arith.constant 9.99999974E-6 : f32
    %12 = vector.broadcast %cst_4 : f32 to vector<16x1xf32>
    %13 = arith.addf %11, %12 : vector<16x1xf32>
    %14 = math.rsqrt %13 : vector<16x1xf32>
    %15 = vector.broadcast %14 : vector<16x1xf32> to vector<16x128xf32>
    %16 = arith.mulf %6, %15 : vector<16x128xf32>
    %c0_5 = arith.constant 0 : index
    %c0_6 = arith.constant 0 : index
    %17 = vector.load %arg2[%c0_5, %c0_6] : memref<16x24xf32, #tpu.memory_space<vmem>>, vector<16x24xf32>
    %18 = arith.truncf %17 : vector<16x24xf32> to vector<16x24xbf16>
    %c0_7 = arith.constant 0 : index
    %c0_8 = arith.constant 0 : index
    %19 = vector.load %arg3[%c0_7, %c0_8] : memref<24x128xbf16, #tpu.memory_space<vmem>>, vector<24x128xbf16>
    %cst_9 = arith.constant dense<0.000000e+00> : vector<16x128xf32>
    %20 = tpu.matmul %18, %19, %cst_9 {dimension_numbers = #tpu.dot_dimension_numbers<[1], [0], [0], [1], [0, 0, 1, 1], [], []>} : vector<16x24xbf16>, vector<24x128xbf16>, vector<16x128xf32> -> vector<16x128xf32>
    %c0_10 = arith.constant 0 : index
    %c0_11 = arith.constant 0 : index
    %21 = vector.load %arg4[%c0_10, %c0_11] : memref<1x128xf32, #tpu.memory_space<vmem>>, vector<1x128xf32>
    %22 = vector.broadcast %21 : vector<1x128xf32> to vector<16x128xf32>
    %23 = arith.addf %20, %22 : vector<16x128xf32>
    %cst_12 = arith.constant 0.000000e+00 : f32
    %24 = vector.broadcast %cst_12 : f32 to vector<16x128xf32>
    %25 = arith.maximumf %23, %24 : vector<16x128xf32>
    %26 = arith.truncf %25 : vector<16x128xf32> to vector<16x128xbf16>
    %c0_13 = arith.constant 0 : index
    %c0_14 = arith.constant 0 : index
    %27 = vector.load %arg5[%c0_13, %c0_14] : memref<128x256xbf16, #tpu.memory_space<vmem>>, vector<128x256xbf16>
    %cst_15 = arith.constant dense<0.000000e+00> : vector<16x256xf32>
    %28 = tpu.matmul %26, %27, %cst_15 {dimension_numbers = #tpu.dot_dimension_numbers<[1], [0], [0], [1], [0, 0, 1, 1], [], []>} : vector<16x128xbf16>, vector<128x256xbf16>, vector<16x256xf32> -> vector<16x256xf32>
    %c0_16 = arith.constant 0 : index
    %c0_17 = arith.constant 0 : index
    %29 = vector.load %arg6[%c0_16, %c0_17] : memref<1x256xf32, #tpu.memory_space<vmem>>, vector<1x256xf32>
    %30 = vector.broadcast %29 : vector<1x256xf32> to vector<16x256xf32>
    %31 = arith.addf %28, %30 : vector<16x256xf32>
    %32 = vector.extract_strided_slice %31 {offsets = [0, 0], sizes = [16, 128], strides = [1, 1]} : vector<16x256xf32> to vector<16x128xf32>
    %33 = vector.extract_strided_slice %31 {offsets = [0, 128], sizes = [16, 128], strides = [1, 1]} : vector<16x256xf32> to vector<16x128xf32>
    %34 = arith.mulf %32, %16 : vector<16x128xf32>
    %35 = arith.addf %34, %33 : vector<16x128xf32>
    %c0_18 = arith.constant 0 : index
    %c0_19 = arith.constant 0 : index
    %36 = vector.load %arg7[%c0_18, %c0_19] : memref<16x128xf32, #tpu.memory_space<vmem>>, vector<16x128xf32>
    tpu.vector_store %arg7[%c0_18, %c0_19], %35 {strides = array<i32>} : memref<16x128xf32, #tpu.memory_space<vmem>>, vector<16x128xf32>,
    return
  }
  func.func @transform_0(%arg0: i32) -> (i32, i32) {
    %c0_i32 = arith.constant 0 : i32
    %c0_i32_0 = arith.constant 0 : i32
    return %arg0, %c0_i32 : i32, i32
  }
  func.func @transform_1(%arg0: i32) -> (i32, i32) {
    %c0_i32 = arith.constant 0 : i32
    %c0_i32_0 = arith.constant 0 : i32
    return %arg0, %c0_i32 : i32, i32
  }
  func.func @transform_2(%arg0: i32) -> (i32, i32) {
    %c0_i32 = arith.constant 0 : i32
    %c0_i32_0 = arith.constant 0 : i32
    %c0_i32_1 = arith.constant 0 : i32
    return %c0_i32, %c0_i32_0 : i32, i32
  }
  func.func @transform_3(%arg0: i32) -> (i32, i32) {
    %c0_i32 = arith.constant 0 : i32
    %c0_i32_0 = arith.constant 0 : i32
    %c0_i32_1 = arith.constant 0 : i32
    return %c0_i32, %c0_i32_0 : i32, i32
  }
  func.func @transform_4(%arg0: i32) -> (i32, i32) {
    %c0_i32 = arith.constant 0 : i32
    %c0_i32_0 = arith.constant 0 : i32
    %c0_i32_1 = arith.constant 0 : i32
    return %c0_i32, %c0_i32_0 : i32, i32
  }
  func.func @transform_5(%arg0: i32) -> (i32, i32) {
    %c0_i32 = arith.constant 0 : i32
    %c0_i32_0 = arith.constant 0 : i32
    %c0_i32_1 = arith.constant 0 : i32
    return %c0_i32, %c0_i32_0 : i32, i32
  }
  func.func @transform_6(%arg0: i32) -> (i32, i32) {
    %c0_i32 = arith.constant 0 : i32
    %c0_i32_0 = arith.constant 0 : i32
    return %arg0, %c0_i32 : i32, i32
  }
}

</mosaic_0001>

<llo_original>
// kernel: _mln_forward_2d.1
$region0: #{_mln_forward_2d.1}
  #allocation0 [shape = 'u32[]', space=smem, size = 0x4, offset = 0x4, fixed_abs, tag = 'smem constant byte address 0x4 - core index']
  #allocation1 [shape = 'u32[144,128]{1,0:T(1,128)}', space=vmem, size = 0x12000, scoped, tag = 'internal scratch']
  %s0 = inlined_call_operand.vmem [shape: f32[32,128], index: 0, kind: input, shape index: {}]
  %s1 = inlined_call_operand.vmem [shape: f32[32,24], index: 1, kind: input, shape index: {}]
  %s2 = inlined_call_operand.vmem [shape: bf16[24,128], index: 2, kind: input, shape index: {}]
  %s3 = inlined_call_operand.vmem [shape: f32[1,128], index: 3, kind: input, shape index: {}]
  %s4 = inlined_call_operand.vmem [shape: bf16[128,256], index: 4, kind: input, shape index: {}]
  %s5 = inlined_call_operand.vmem [shape: f32[1,256], index: 5, kind: input, shape index: {}]
  %s6 = inlined_call_operand.vmem [shape: f32[32,128], index: 6, kind: output, shape index: {}]
  %s7 = sld [smem:[#allocation0]]
  $region57: #{_mln_forward_2d.1} parent=0
    _
  %s9 = ssub.s32 1, %s7
  %s10 = scalar_select 0, %s9, %s7
  loop: start=0, step=1, limit=4
  $region2: #{_mln_forward_2d.1} parent=0 // loop_pre_header
    _
  $region3: #{_mln_forward_2d.1} parent=0 // loop_header
    %s12 = sphi 0, %s16
    %p13 = scmp.ge.s32.totalorder %s12, 4
    %s22 = sphi 0, %s24
    %s25 = sphi 0, %s22
    %s26 = sphi 0, %s25
    %s42 = sphi 0, %s26
    %s48 = sphi 0, %s50
    %s51 = sphi 0, %s48
    %s52 = sphi 0, %s51
    %s68 = sphi 0, %s52
    %s72 = sphi 0, %s72
    %s74 = sphi 0, %s72
    %s75 = sphi 0, %s74
    %s89 = sphi 0, %s75
    %s93 = sphi 0, %s93
    %s95 = sphi 0, %s93
    %s96 = sphi 0, %s95
    %s110 = sphi 0, %s96
    %s114 = sphi 0, %s114
    %s116 = sphi 0, %s114
    %s117 = sphi 0, %s116
    %s131 = sphi 0, %s117
    %s135 = sphi 0, %s135
    %s137 = sphi 0, %s135
    %s138 = sphi 0, %s137
    %s152 = sphi 0, %s138
    %s158 = sphi 0, %s160
    %s161 = sphi 0, %s158
    %s162 = sphi 0, %s161
    %s178 = sphi 0, %s162
  $region4: #{_mln_forward_2d.1} parent=0 // loop_header_branch
    %15 = sbr.rel (%p13) target = $region8
  $region5: #{_mln_forward_2d.1} parent=0 // loop_body
    %s17 = ssub.s32 %s12, 1
    %s18 = ssub.s32 %s12, 2
    %s19 = sadd.s32 %s12, 1
    %s20 = ssub.s32 %s12, %s19
    %p21 = scmp.eq.s32.totalorder %s20, 0
    %s23 = sadd.s32 %s22, 1
    %s24 = scalar_select %p21, %s22, %s23
    %p27 = pneg %p21
    %p28 = scmp.eq.s32.totalorder %s12, 1
    %p29 = por %p27, %p28
    %p30 = scmp.ne.s32.totalorder %s22, %s25
    %p31 = scmp.eq.s32.totalorder %s12, 0
    %p32 = por %p30, %p31
    %p33 = scmp.ne.s32.totalorder %s22, %s25
    %p34 = scmp.eq.s32.totalorder %s17, 1
    %p35 = por %p33, %p34
    %p36 = scmp.ne.s32.totalorder %s25, %s26
    %p37 = scmp.eq.s32.totalorder %s17, 0
    %p38 = por %p36, %p37
    %p39 = scmp.ne.s32.totalorder %s25, %s26
    %p40 = scmp.eq.s32.totalorder %s18, 1
    %p41 = por %p39, %p40
    %p43 = scmp.ne.s32.totalorder %s26, %s42
    %p44 = scmp.eq.s32.totalorder %s18, 0
    %p45 = por %p43, %p44
    %s46 = ssub.s32 %s12, %s19
    %p47 = scmp.eq.s32.totalorder %s46, 0
    %s49 = sadd.s32 %s48, 1
    %s50 = scalar_select %p47, %s48, %s49
    %p53 = pneg %p47
    %p54 = scmp.eq.s32.totalorder %s12, 1
    %p55 = por %p53, %p54
    %p56 = scmp.ne.s32.totalorder %s48, %s51
    %p57 = scmp.eq.s32.totalorder %s12, 0
    %p58 = por %p56, %p57
    %p59 = scmp.ne.s32.totalorder %s48, %s51
    %p60 = scmp.eq.s32.totalorder %s17, 1
    %p61 = por %p59, %p60
    %p62 = scmp.ne.s32.totalorder %s51, %s52
    %p63 = scmp.eq.s32.totalorder %s17, 0
    %p64 = por %p62, %p63
    %p65 = scmp.ne.s32.totalorder %s51, %s52
    %p66 = scmp.eq.s32.totalorder %s18, 1
    %p67 = por %p65, %p66
    %p69 = scmp.ne.s32.totalorder %s52, %s68
    %p70 = scmp.eq.s32.totalorder %s18, 0
    %p71 = por %p69, %p70
    %s73 = sadd.s32 %s72, 1
    %p76 = scmp.eq.s32.totalorder %s12, 1
    %p77 = scmp.ne.s32.totalorder %s72, %s74
    %p78 = scmp.eq.s32.totalorder %s12, 0
    %p79 = por %p77, %p78
    %p80 = scmp.ne.s32.totalorder %s72, %s74
    %p81 = scmp.eq.s32.totalorder %s17, 1
    %p82 = por %p80, %p81
    %p83 = scmp.ne.s32.totalorder %s74, %s75
    %p84 = scmp.eq.s32.totalorder %s17, 0
    %p85 = por %p83, %p84
    %p86 = scmp.ne.s32.totalorder %s74, %s75
    %p87 = scmp.eq.s32.totalorder %s18, 1
    %p88 = por %p86, %p87
    %p90 = scmp.ne.s32.totalorder %s75, %s89
    %p91 = scmp.eq.s32.totalorder %s18, 0
    %p92 = por %p90, %p91
    %s94 = sadd.s32 %s93, 1
    %p97 = scmp.eq.s32.totalorder %s12, 1
    %p98 = scmp.ne.s32.totalorder %s93, %s95
    %p99 = scmp.eq.s32.totalorder %s12, 0
    %p100 = por %p98, %p99
    %p101 = scmp.ne.s32.totalorder %s93, %s95
    %p102 = scmp.eq.s32.totalorder %s17, 1
    %p103 = por %p101, %p102
    %p104 = scmp.ne.s32.totalorder %s95, %s96
    %p105 = scmp.eq.s32.totalorder %s17, 0
    %p106 = por %p104, %p105
    %p107 = scmp.ne.s32.totalorder %s95, %s96
    %p108 = scmp.eq.s32.totalorder %s18, 1
    %p109 = por %p107, %p108
    %p111 = scmp.ne.s32.totalorder %s96, %s110
    %p112 = scmp.eq.s32.totalorder %s18, 0
    %p113 = por %p111, %p112
    %s115 = sadd.s32 %s114, 1
    %p118 = scmp.eq.s32.totalorder %s12, 1
    %p119 = scmp.ne.s32.totalorder %s114, %s116
    %p120 = scmp.eq.s32.totalorder %s12, 0
    %p121 = por %p119, %p120
    %p122 = scmp.ne.s32.totalorder %s114, %s116
    %p123 = scmp.eq.s32.totalorder %s17, 1
    %p124 = por %p122, %p123
    %p125 = scmp.ne.s32.totalorder %s116, %s117
    %p126 = scmp.eq.s32.totalorder %s17, 0
    %p127 = por %p125, %p126
    %p128 = scmp.ne.s32.totalorder %s116, %s117
    %p129 = scmp.eq.s32.totalorder %s18, 1
    %p130 = por %p128, %p129
    %p132 = scmp.ne.s32.totalorder %s117, %s131
    %p133 = scmp.eq.s32.totalorder %s18, 0
    %p134 = por %p132, %p133
    %s136 = sadd.s32 %s135, 1
    %p139 = scmp.eq.s32.totalorder %s12, 1
    %p140 = scmp.ne.s32.totalorder %s135, %s137
    %p141 = scmp.eq.s32.totalorder %s12, 0
    %p142 = por %p140, %p141
    %p143 = scmp.ne.s32.totalorder %s135, %s137
    %p144 = scmp.eq.s32.totalorder %s17, 1
    %p145 = por %p143, %p144
    %p146 = scmp.ne.s32.totalorder %s137, %s138
    %p147 = scmp.eq.s32.totalorder %s17, 0
    %p148 = por %p146, %p147
    %p149 = scmp.ne.s32.totalorder %s137, %s138
    %p150 = scmp.eq.s32.totalorder %s18, 1
    %p151 = por %p149, %p150
    %p153 = scmp.ne.s32.totalorder %s138, %s152
    %p154 = scmp.eq.s32.totalorder %s18, 0
    %p155 = por %p153, %p154
    %s156 = ssub.s32 %s12, %s19
    %p157 = scmp.eq.s32.totalorder %s156, 0
    %s159 = sadd.s32 %s158, 1
    %s160 = scalar_select %p157, %s158, %s159
    %p163 = pneg %p157
    %p164 = scmp.eq.s32.totalorder %s12, 1
    %p165 = por %p163, %p164
    %p166 = scmp.ne.s32.totalorder %s158, %s161
    %p167 = scmp.eq.s32.totalorder %s12, 0
    %p168 = por %p166, %p167
    %p169 = scmp.ne.s32.totalorder %s158, %s161
    %p170 = scmp.eq.s32.totalorder %s17, 1
    %p171 = por %p169, %p170
    %p172 = scmp.ne.s32.totalorder %s161, %s162
    %p173 = scmp.eq.s32.totalorder %s17, 0
    %p174 = por %p172, %p173
    %p175 = scmp.ne.s32.totalorder %s161, %s162
    %p176 = scmp.eq.s32.totalorder %s18, 1
    %p177 = por %p175, %p176
    %p179 = scmp.ne.s32.totalorder %s162, %s178
    %p180 = scmp.eq.s32.totalorder %s18, 0
    %p181 = por %p179, %p180
    %p182 = scmp.le.s32.totalorder 1, %s12
    %p183 = scmp.lt.s32.totalorder %s12, 3
    %p184 = pnand %p182, %p183
    %p185 = pneg %p184
    // Predicated region
    $region9: #{_mln_forward_2d.1} parent=5 // pred_check
      _
    $region10: #{_mln_forward_2d.1} parent=5 // pred_check_branch
      %187 = sbr.rel (%p184) target = $region12
    $region11: #{_mln_forward_2d.1} parent=5 // pred_region
      %s188 = ssub.s32 %s12, 1
      // Predicated region
      $region13: #{_mln_forward_2d.1} parent=11 // pred_check
        %p189 = pneg %p85
      $region14: #{_mln_forward_2d.1} parent=11 // pred_check_branch
        %191 = sbr.rel (%p189) target = $region16
      $region15: #{_mln_forward_2d.1} parent=11 // pred_region
        _
      $region16: #{_mln_forward_2d.1} parent=11 // pred_fallthru
        _
      // Predicated region
      $region17: #{_mln_forward_2d.1} parent=11 // pred_check
        %p192 = pneg %p106
      $region18: #{_mln_forward_2d.1} parent=11 // pred_check_branch
        %194 = sbr.rel (%p192) target = $region20
      $region19: #{_mln_forward_2d.1} parent=11 // pred_region
        _
      $region20: #{_mln_forward_2d.1} parent=11 // pred_fallthru
        _
      // Predicated region
      $region21: #{_mln_forward_2d.1} parent=11 // pred_check
        %p195 = pneg %p127
      $region22: #{_mln_forward_2d.1} parent=11 // pred_check_branch
        %197 = sbr.rel (%p195) target = $region24
      $region23: #{_mln_forward_2d.1} parent=11 // pred_region
        _
      $region24: #{_mln_forward_2d.1} parent=11 // pred_fallthru
        _
      // Predicated region
      $region25: #{_mln_forward_2d.1} parent=11 // pred_check
        %p198 = pneg %p148
      $region26: #{_mln_forward_2d.1} parent=11 // pred_check_branch
        %200 = sbr.rel (%p198) target = $region28
      $region27: #{_mln_forward_2d.1} parent=11 // pred_region
        _
      $region28: #{_mln_forward_2d.1} parent=11 // pred_fallthru
        _
    $region12: #{_mln_forward_2d.1} parent=5 // pred_fallthru
      _
    %p201 = scmp.lt.s32.totalorder %s12, 2
    // Predicated region
    $region29: #{_mln_forward_2d.1} parent=5 // pred_check
      %p202 = pneg %p201
    $region30: #{_mln_forward_2d.1} parent=5 // pred_check_branch
      %204 = sbr.rel (%p202) target = $region32
    $region31: #{_mln_forward_2d.1} parent=5 // pred_region
      // Predicated region
      $region33: #{_mln_forward_2d.1} parent=31 // pred_check
        %p205 = pneg %p32
      $region34: #{_mln_forward_2d.1} parent=31 // pred_check_branch
        %207 = sbr.rel (%p205) target = $region36
      $region35: #{_mln_forward_2d.1} parent=31 // pred_region
        %s208 = smul.u32 2, %s12
        %p209 = scmp.lt.s32.totalorder %s208, 3
        %s210 = scalar_select %p209, %s208, 3
        %s211 = smul.addr %s210, 8
        %s212 = scalar_lea.vmem %s0, %s211
        %s213 = smul.u32 2, %s12
      $region36: #{_mln_forward_2d.1} parent=31 // pred_fallthru
        _
      // Predicated region
      $region37: #{_mln_forward_2d.1} parent=31 // pred_check
        %p214 = pneg %p58
      $region38: #{_mln_forward_2d.1} parent=31 // pred_check_branch
        %216 = sbr.rel (%p214) target = $region40
      $region39: #{_mln_forward_2d.1} parent=31 // pred_region
        %s217 = smul.u32 2, %s12
        %p218 = scmp.lt.s32.totalorder %s217, 3
        %s219 = scalar_select %p218, %s217, 3
        %s220 = smul.addr %s219, 8
        %s221 = scalar_lea.vmem %s1, %s220
        %s222 = smul.u32 2, %s12
      $region40: #{_mln_forward_2d.1} parent=31 // pred_fallthru
        _
    $region32: #{_mln_forward_2d.1} parent=5 // pred_fallthru
      _
    %p223 = scmp.le.s32.totalorder 1, %s12
    %p224 = scmp.lt.s32.totalorder %s12, 3
    %p225 = pnand %p223, %p224
    %p226 = pneg %p225
    // Predicated region
    $region41: #{_mln_forward_2d.1} parent=5 // pred_check
      _
    $region42: #{_mln_forward_2d.1} parent=5 // pred_check_branch
      %228 = sbr.rel (%p225) target = $region44
    $region43: #{_mln_forward_2d.1} parent=5 // pred_region
      %s229 = ssub.s32 %s12, 1
      %s230 = smul.u32 2, %s17
      %p231 = scmp.lt.s32.totalorder %s230, 3
      %s232 = scalar_select %p231, %s230, 3
      %s233 = smul.addr %s232, 8
      %s234 = scalar_lea.vmem %s0, %s233
      %p235 = pneg %p38
      %p236 = pneg %p35
      %s237 = smul.u32 2, %s17
      %p238 = scmp.lt.s32.totalorder %s237, 3
      %s239 = scalar_select %p238, %s237, 3
      %s240 = smul.addr %s239, 8
      %s241 = scalar_lea.vmem %s1, %s240
      %p242 = pneg %p64
      %p243 = pneg %p61
      %p244 = pneg %p85
      %p245 = pneg %p82
      %p246 = pneg %p106
      %p247 = pneg %p103
      %p248 = pneg %p127
      %p249 = pneg %p124
      %p250 = pneg %p148
      %p251 = pneg %p145
      %p252 = pneg %p174
      %p253 = pneg %p171
      %s254 = smul.u32 2, %s17
      %p255 = scmp.lt.s32.totalorder %s254, 3
      %s256 = scalar_select %p255, %s254, 3
      %s257 = smul.addr %s256, 8
      %s258 = scalar_lea.vmem %s6, %s257
      %s259 = smul.u32 2, %s17
      %p260 = scmp.lt.s32.totalorder %s259, 3
      %s261 = scalar_select %p260, %s259, 3
      %s262 = smul.addr %s261, 8
      %s263 = scalar_lea.vmem %s0, %s262
      %s264 = smul.u32 2, %s17
      %s265 = smul.u32 2, %s17
      %p266 = scmp.lt.s32.totalorder %s265, 3
      %s267 = scalar_select %p266, %s265, 3
      %s268 = smul.addr %s267, 8
      %s269 = scalar_lea.vmem %s1, %s268
      %s270 = smul.u32 2, %s17
      %s271 = smul.u32 2, %s17
      %p272 = scmp.lt.s32.totalorder %s271, 3
      %s273 = scalar_select %p272, %s271, 3
      %s274 = smul.addr %s273, 8
      %s275 = scalar_lea.vmem %s6, %s274
      %s276 = smul.u32 2, %s17
      %v278 = vld [vmem:[%s263] sm:$0xff]
      %v279 = vld [vmem:[%s263 + $0x8] sm:$0xff]
      %280 = vadd.xlane.f32.xlu0 %v278
      %v281 = vpop.xlane.xlu0 %280
      %282 = vadd.xlane.f32.xlu0 %v279
      %v283 = vpop.xlane.xlu0 %282
      %v284 = vmul.f32 %v281, 0.0078125
      %v285 = vmul.f32 %v283, 0.0078125
      %v286 = vsub.f32 %v278, %v284
      %v287 = vsub.f32 %v279, %v285
      %v288 = vmul.f32 %v286, %v286
      %v289 = vmul.f32 %v287, %v287
      %290 = vadd.xlane.f32.xlu0 %v288
      %v291 = vpop.xlane.xlu0 %290
      %292 = vadd.xlane.f32.xlu0 %v289
      %v293 = vpop.xlane.xlu0 %292
      %v294 = vmul.f32 %v291, 0.0078125
      %v295 = vmul.f32 %v293, 0.0078125
      %v296 = vadd.f32 %v294, 1e-05
      %v297 = vadd.f32 %v295, 1e-05
      %v298 = vrsqrt.pop %v296
      %v299 = vrsqrt.pop %v297
      %v300 = vmul.f32 %v286, %v298
      %v301 = vmul.f32 %v287, %v299
      %v302 = vld [vmem:[%s269] sm:$0xff]
      %v303 = vld [vmem:[%s269 + $0x8] sm:$0xff]
      %v304 = vpack.c.bf16 %v303, %v302
      %v305 = vld [vmem:[%s2] sm:$0xf]
      %v306 = vld [vmem:[%s2 + $0x4] sm:$0xf]
      %v307 = vld [vmem:[%s2 + $0x8] sm:$0xf]
      %v308 = vld [vmem:[%s3] sm:$0x1]
      %v310 = vlaneseq
      %v311 = vshrl.u32 %v310, 7
      %v312 = vsub.s32 0, %v311
      %v313 = vrot.slane %v308, %v312
      %v318 = vunpack.c.l.b16 %v305
      %v319 = vunpack.c.l.b16 %v306
      %v320 = vunpack.c.l.b16 %v307
      %v321 = vpack.c.b16 %v319, %v318
      %v322 = vpack.c.b16 %v320, %v320
      %vm324 = vcmask 195584
      %v326 = vsel %vm324, %v304, 0
      %vm328 = vcmask 1043456
      %v330 = vsel %vm328, %v322, 0
      %332 = vmatprep.subr.bf16.mxu0 0
      %333 = vmatpush1.bf16.msra.mxu0 %v321
      %334 = vmatprep.subr.bf16.mxu0 0
      %335 = vmatpush1.bf16.msra.mxu0 %v330
      %336 = vmatprep.subr.bf16.mxu0 0
      %337 = vmatpush1.bf16.msra.mxu0 0
      %338 = vmatprep.subr.bf16.mxu0 0
      %339 = vmatpush1.bf16.msra.mxu0 0
      %340 = vmatprep.subr.bf16.mxu0 0
      %341 = vmatpush1.bf16.msra.mxu0 0
      %342 = vmatprep.subr.bf16.mxu0 0
      %343 = vmatpush1.bf16.msra.mxu0 0
      %344 = vmatprep.subr.bf16.mxu0 0
      %345 = vmatpush1.bf16.msra.mxu0 0
      %346 = vmatprep.subr.bf16.mxu0 0
      %347 = vmatpush1.bf16.msra.mxu0 0
      %348 = vmatprep.subr.bf16.mxu0 0
      %349 = vmatpush1.bf16.msra.mxu0 0
      %350 = vmatprep.subr.bf16.mxu0 0
      %351 = vmatpush1.bf16.msra.mxu0 0
      %352 = vmatprep.subr.bf16.mxu0 0
      %353 = vmatpush1.bf16.msra.mxu0 0
      %354 = vmatprep.subr.bf16.mxu0 0
      %355 = vmatpush1.bf16.msra.mxu0 0
      %356 = vmatprep.subr.bf16.mxu0 0
      %357 = vmatpush1.bf16.msra.mxu0 0
      %358 = vmatprep.subr.bf16.mxu0 0
      %359 = vmatpush1.bf16.msra.mxu0 0
      %360 = vmatprep.subr.bf16.mxu0 0
      %361 = vmatpush1.bf16.msra.mxu0 0
      %362 = vmatprep.subr.bf16.mxu0 0
      %363 = vmatpush1.bf16.msra.mxu0 0
      %364 = vmatprep.mubr.bf16.mxu0 0
      %365 = vmatmul.mubr.bf16.gmra.mrb[0].mxu0 %v326
      %v366 = vpop.f32.mrb[0].mxu0
      %v367 = vadd.f32 %v313, %v366
      %v368 = vpop.f32.mrb[0].mxu0
      %v369 = vpop.f32.mrb[0].mxu0
      %v370 = vadd.f32 %v313, %v369
      %v371 = vpop.f32.mrb[0].mxu0
      %372 = vdwg.mxu0
      %v373 = vmax.f32 %v367, 0.0
      %v374 = vmax.f32 %v370, 0.0
      %v375 = vpack.c.bf16 %v374, %v373
      %v376 = vld [vmem:[%s4] sm:$0xff]
      %v377 = vld [vmem:[%s4 + $0x8] sm:$0xff]
      %v378 = vld [vmem:[%s4 + $0x10] sm:$0xff]
      %v379 = vld [vmem:[%s4 + $0x18] sm:$0xff]
      %v380 = vld [vmem:[%s4 + $0x20] sm:$0xff]
      %v381 = vld [vmem:[%s4 + $0x28] sm:$0xff]
      %v382 = vld [vmem:[%s4 + $0x30] sm:$0xff]
      %v383 = vld [vmem:[%s4 + $0x38] sm:$0xff]
      %v384 = vld [vmem:[%s4 + $0x40] sm:$0xff]
      %v385 = vld [vmem:[%s4 + $0x48] sm:$0xff]
      %v386 = vld [vmem:[%s4 + $0x50] sm:$0xff]
      %v387 = vld [vmem:[%s4 + $0x58] sm:$0xff]
      %v388 = vld [vmem:[%s4 + $0x60] sm:$0xff]
      %v389 = vld [vmem:[%s4 + $0x68] sm:$0xff]
      %v390 = vld [vmem:[%s4 + $0x70] sm:$0xff]
      %v391 = vld [vmem:[%s4 + $0x78] sm:$0xff]
      %v392 = vld [vmem:[%s5] sm:$0x3]
      %v394 = vlaneseq
      %v395 = vshrl.u32 %v394, 7
      %v396 = vsub.s32 0, %v395
      %v397 = vrot.slane %v392, %v396
      %v398 = vlaneseq
      %v399 = vshrl.u32 %v398, 7
      %v400 = vsub.s32 1, %v399
      %v401 = vrot.slane %v392, %v400
      %v420 = vunpack.c.l.b16 %v376
      %v421 = vunpack.c.h.b16 %v376
      %v422 = vunpack.c.l.b16 %v377
      %v423 = vunpack.c.h.b16 %v377
      %v424 = vunpack.c.l.b16 %v378
      %v425 = vunpack.c.h.b16 %v378
      %v426 = vunpack.c.l.b16 %v379
      %v427 = vunpack.c.h.b16 %v379
      %v428 = vunpack.c.l.b16 %v380
      %v429 = vunpack.c.h.b16 %v380
      %v430 = vunpack.c.l.b16 %v381
      %v431 = vunpack.c.h.b16 %v381
      %v432 = vunpack.c.l.b16 %v382
      %v433 = vunpack.c.h.b16 %v382
      %v434 = vunpack.c.l.b16 %v383
      %v435 = vunpack.c.h.b16 %v383
      %v436 = vunpack.c.l.b16 %v384
      %v437 = vunpack.c.h.b16 %v384
      %v438 = vunpack.c.l.b16 %v385
      %v439 = vunpack.c.h.b16 %v385
      %v440 = vunpack.c.l.b16 %v386
      %v441 = vunpack.c.h.b16 %v386
      %v442 = vunpack.c.l.b16 %v387
      %v443 = vunpack.c.h.b16 %v387
      %v444 = vunpack.c.l.b16 %v388
      %v445 = vunpack.c.h.b16 %v388
      %v446 = vunpack.c.l.b16 %v389
      %v447 = vunpack.c.h.b16 %v389
      %v448 = vunpack.c.l.b16 %v390
      %v449 = vunpack.c.h.b16 %v390
      %v450 = vunpack.c.l.b16 %v391
      %v451 = vunpack.c.h.b16 %v391
      %v452 = vpack.c.b16 %v422, %v420
      %v453 = vpack.c.b16 %v423, %v421
      %v454 = vpack.c.b16 %v426, %v424
      %v455 = vpack.c.b16 %v427, %v425
      %v456 = vpack.c.b16 %v430, %v428
      %v457 = vpack.c.b16 %v431, %v429
      %v458 = vpack.c.b16 %v434, %v432
      %v459 = vpack.c.b16 %v435, %v433
      %v460 = vpack.c.b16 %v438, %v436
      %v461 = vpack.c.b16 %v439, %v437
      %v462 = vpack.c.b16 %v442, %v440
      %v463 = vpack.c.b16 %v443, %v441
      %v464 = vpack.c.b16 %v446, %v444
      %v465 = vpack.c.b16 %v447, %v445
      %v466 = vpack.c.b16 %v450, %v448
      %v467 = vpack.c.b16 %v451, %v449
      %484 = vmatprep.subr.bf16.mxu0 %v453
      %485 = vmatpush1.bf16.msra.mxu0 %v452
      %486 = vmatprep.subr.bf16.mxu0 %v455
      %487 = vmatpush1.bf16.msra.mxu0 %v454
      %488 = vmatprep.subr.bf16.mxu0 %v457
      %489 = vmatpush1.bf16.msra.mxu0 %v456
      %490 = vmatprep.subr.bf16.mxu0 %v459
      %491 = vmatpush1.bf16.msra.mxu0 %v458
      %492 = vmatprep.subr.bf16.mxu0 %v461
      %493 = vmatpush1.bf16.msra.mxu0 %v460
      %494 = vmatprep.subr.bf16.mxu0 %v463
      %495 = vmatpush1.bf16.msra.mxu0 %v462
      %496 = vmatprep.subr.bf16.mxu0 %v465
      %497 = vmatpush1.bf16.msra.mxu0 %v464
      %498 = vmatprep.subr.bf16.mxu0 %v467
      %499 = vmatpush1.bf16.msra.mxu0 %v466
      %500 = vmatprep.subr.bf16.mxu0 0
      %501 = vmatpush1.bf16.msra.mxu0 0
      %502 = vmatprep.subr.bf16.mxu0 0
      %503 = vmatpush1.bf16.msra.mxu0 0
      %504 = vmatprep.subr.bf16.mxu0 0
      %505 = vmatpush1.bf16.msra.mxu0 0
      %506 = vmatprep.subr.bf16.mxu0 0
      %507 = vmatpush1.bf16.msra.mxu0 0
      %508 = vmatprep.subr.bf16.mxu0 0
      %509 = vmatpush1.bf16.msra.mxu0 0
      %510 = vmatprep.subr.bf16.mxu0 0
      %511 = vmatpush1.bf16.msra.mxu0 0
      %512 = vmatprep.subr.bf16.mxu0 0
      %513 = vmatpush1.bf16.msra.mxu0 0
      %514 = vmatprep.subr.bf16.mxu0 0
      %515 = vmatpush1.bf16.msra.mxu0 0
      %516 = vmatprep.mubr.bf16.mxu0 0
      %517 = vmatmul.mubr.bf16.gmra.mrb[0].mxu0 %v375
      %v518 = vpop.f32.mrb[0].mxu0
      %v519 = vadd.f32 %v397, %v518
      %v520 = vpop.f32.mrb[0].mxu0
      %v521 = vadd.f32 %v401, %v520
      %v522 = vpop.f32.mrb[0].mxu0
      %v523 = vadd.f32 %v397, %v522
      %v524 = vpop.f32.mrb[0].mxu0
      %v525 = vadd.f32 %v401, %v524
      %526 = vdwg.mxu0
      %v527 = vmul.f32 %v519, %v300
      %v528 = vmul.f32 %v523, %v301
      %v529 = vadd.f32 %v527, %v521
      %v530 = vadd.f32 %v528, %v525
      %531 = vst [vmem:[%s275] sm:$0xff] %v529
      %532 = vst [vmem:[%s275 + $0x8] sm:$0xff] %v530
      %s533 = smul.u32 2, %s17
      %p534 = scmp.lt.s32.totalorder %s533, 3
      %s535 = scalar_select %p534, %s533, 3
      %s536 = smul.addr %s535, 8
      %s537 = scalar_lea.vmem %s6, %s536
      // Predicated region
      $region45: #{_mln_forward_2d.1} parent=43 // pred_check
        %p538 = pneg %p171
      $region46: #{_mln_forward_2d.1} parent=43 // pred_check_branch
        %540 = sbr.rel (%p538) target = $region48
      $region47: #{_mln_forward_2d.1} parent=43 // pred_region
        %s541 = smul.u32 2, %s17
      $region48: #{_mln_forward_2d.1} parent=43 // pred_fallthru
        _
    $region44: #{_mln_forward_2d.1} parent=5 // pred_fallthru
      _
    %p542 = scmp.le.s32.totalorder 2, %s12
    // Predicated region
    $region49: #{_mln_forward_2d.1} parent=5 // pred_check
      %p543 = pneg %p542
    $region50: #{_mln_forward_2d.1} parent=5 // pred_check_branch
      %545 = sbr.rel (%p543) target = $region52
    $region51: #{_mln_forward_2d.1} parent=5 // pred_region
      %s546 = ssub.s32 %s12, 2
      // Predicated region
      $region53: #{_mln_forward_2d.1} parent=51 // pred_check
        %p547 = pneg %p177
      $region54: #{_mln_forward_2d.1} parent=51 // pred_check_branch
        %549 = sbr.rel (%p547) target = $region56
      $region55: #{_mln_forward_2d.1} parent=51 // pred_region
        %s550 = smul.u32 2, %s18
        %p551 = scmp.lt.s32.totalorder %s550, 3
        %s552 = scalar_select %p551, %s550, 3
        %s553 = smul.addr %s552, 8
        %s554 = scalar_lea.vmem %s6, %s553
      $region56: #{_mln_forward_2d.1} parent=51 // pred_fallthru
        _
    $region52: #{_mln_forward_2d.1} parent=5 // pred_fallthru
      _
  $region6: #{_mln_forward_2d.1} parent=0 // loop_footer
    %s16 = sadd.s32 1, %s12
  $region7: #{_mln_forward_2d.1} parent=0 // loop_footer_branch
    %11 = sbr.rel target = $region3
  $region8: #{_mln_forward_2d.1} parent=0 // loop_exit
    _

</llo_original>
